<compile_context>
chip_gen: v6e
topology: v6e:2x2x1
jax: 0.10.0
libtpu: 0.0.40
codegen_flags: <defaults>
</compile_context>

<pallas_src>
import jax
import jax.numpy as jnp
from jax.experimental import pallas as pl
from jax.experimental.pallas import tpu as pltpu


def _round_up(x, m):
    return ((x + m - 1) // m) * m


def _classifier_kernel(repr_ref, meta_ref, w_ref, bias_ref, out_ref):
    """Classifier head for one block of TB graphs.

    repr_ref : (TB, N, D) f32  node 'repr' features (padded node rows are zero)
    meta_ref : (TB, 3)    i32  columns = [head idx, tail idx, true node count]
    w_ref    : (3*D, Rp)  f32  W_final weight (transposed, lane-padded)
    bias_ref : (1, Rp)    f32  W_final bias (lane-padded)
    out_ref  : (TB, Rp)   f32  scores
    """
    nodes = repr_ref[...]                                      # (TB, N, D)
    tb, n, d = nodes.shape

    meta = meta_ref[...]                                       # (TB, 3) i32
    head = meta[:, 0:1]                                        # (TB, 1)
    tail = meta[:, 1:2]                                        # (TB, 1)
    cnt = jnp.maximum(meta[:, 2:3], 1)                         # (TB, 1), >=1

    node_iota = jax.lax.broadcasted_iota(jnp.int32, (tb, n), 1)  # (TB, N)

    # Fold 1/count into the valid-node mask -> mean via a single masked sum.
    inv_cnt = 1.0 / cnt.astype(jnp.float32)                    # (TB, 1)
    mean_w = jnp.where(node_iota < cnt, inv_cnt, 0.0)          # (TB, N)
    head_oh = (node_iota == head).astype(jnp.float32)          # (TB, N)
    tail_oh = (node_iota == tail).astype(jnp.float32)          # (TB, N)

    # mean_nodes(complete_graph, 'repr'), gsl_hidden[head_ids], gsl_hidden[tail_ids]
    g_out = jnp.sum(nodes * mean_w[:, :, None], axis=1)        # (TB, D)
    head_h = jnp.sum(nodes * head_oh[:, :, None], axis=1)      # (TB, D)
    tail_h = jnp.sum(nodes * tail_oh[:, :, None], axis=1)      # (TB, D)

    # cat([g_out, head, tail], dim=1) @ W_final^T + b, expressed as three MXU
    # matmuls against contiguous weight slabs (no in-VMEM concat copy).
    out = jnp.dot(g_out, w_ref[pl.ds(0, d), :],
                  preferred_element_type=jnp.float32)
    out += jnp.dot(head_h, w_ref[pl.ds(d, d), :],
                   preferred_element_type=jnp.float32)
    out += jnp.dot(tail_h, w_ref[pl.ds(2 * d, d), :],
                   preferred_element_type=jnp.float32)
    out_ref[...] = out + bias_ref[...]


def classifier_forward(repr_nodes, head_idx, tail_idx, node_counts,
                       w_final, b_final, *, tb=None):
    """repr_nodes: (B, N, D) f32; head/tail_idx, node_counts: (B,) i32;
       w_final: (3*D, R) f32; b_final: (1, R) f32  ->  scores (B, R) f32."""
    B, N, D = repr_nodes.shape
    K, R = w_final.shape
    assert K == 3 * D

    if tb is None:
        # TB graphs per grid step: multiple of 8 (sublane-dense), capped at 256
        # and by a ~8 MiB VMEM budget for the (double-buffered) repr block.
        bytes_per_graph = N * D * 4
        max_tb = max(8, ((8 * 1024 * 1024) // max(bytes_per_graph, 1)) // 8 * 8)
        tb = min(256, max_tb, _round_up(B, 8))
    B_pad = _round_up(B, tb)
    R_pad = _round_up(R, 128)          # lane-dense output stores

    pad_b = B_pad - B
    repr_p = jnp.pad(repr_nodes.astype(jnp.float32),
                     ((0, pad_b), (0, 0), (0, 0)))
    meta = jnp.stack([head_idx.astype(jnp.int32),
                      tail_idx.astype(jnp.int32),
                      node_counts.astype(jnp.int32)], axis=1)   # (B, 3)
    meta_p = jnp.pad(meta, ((0, pad_b), (0, 0)))                # padded cnt=0 -> clamped in kernel
    w_p = jnp.pad(w_final.astype(jnp.float32), ((0, 0), (0, R_pad - R)))
    b_p = jnp.pad(b_final.astype(jnp.float32).reshape(1, R),
                  ((0, 0), (0, R_pad - R)))

    grid_spec = pltpu.PrefetchScalarGridSpec(
        num_scalar_prefetch=0,
        grid=(B_pad // tb,),
        in_specs=[
            pl.BlockSpec((tb, N, D), lambda i: (i, 0, 0)),      # repr block
            pl.BlockSpec((tb, 3), lambda i: (i, 0)),            # [head, tail, cnt]
            pl.BlockSpec((3 * D, R_pad), lambda i: (0, 0)),     # W_final (resident)
            pl.BlockSpec((1, R_pad), lambda i: (0, 0)),         # bias (resident)
        ],
        out_specs=pl.BlockSpec((tb, R_pad), lambda i: (i, 0)),
    )
    out = pl.pallas_call(
        _classifier_kernel,
        out_shape=jax.ShapeDtypeStruct((B_pad, R_pad), jnp.float32),
        grid_spec=grid_spec,
        compiler_params=pltpu.CompilerParams(
            dimension_semantics=("parallel",)),
    )(repr_p, meta_p, w_p, b_p)
    return out[:B, :R]


if __name__ == "__main__":
    # ---- synthetic hyper-params consistent with Classifier_model.__init__ ----
    emb_dim = 32
    num_gcn_layers = 2
    num_infer_layers = 1
    # use_pre_embeddings = True  ->  (1 + gcn + infer) * emb_dim
    score_dim = (1 + num_gcn_layers + num_infer_layers) * emb_dim   # 128
    n_rel = 16
    B = 2      # batched subgraphs
    N = 8      # nodes per subgraph (padded)

    key = jax.random.PRNGKey(0)
    k_repr, k_w, k_b = jax.random.split(key, 3)

    # gsl_model output: per-node 'repr' already flattened to score_dim
    repr_nodes = jax.random.normal(k_repr, (B, N, score_dim), dtype=jnp.float32)

    # W_final (PyTorch shape (n_rel, 3*score_dim); we store the transpose)
    w_final = (jax.random.normal(k_w, (3 * score_dim, n_rel), dtype=jnp.float32)
               * (1.0 / jnp.sqrt(3.0 * score_dim)))
    b_final = jax.random.normal(k_b, (1, n_rel), dtype=jnp.float32) * 0.01

    # true node counts per graph (graphs padded to N rows); zero padded rows
    node_counts = jnp.array([6, 8], dtype=jnp.int32)
    valid_mask = (jnp.arange(N)[None, :] < node_counts[:, None])
    repr_nodes = repr_nodes * valid_mask[:, :, None].astype(jnp.float32)

    # node 'id' field: one node with id==1 (head), one with id==2 (tail)
    node_id = jnp.zeros((B, N), dtype=jnp.int32)
    node_id = node_id.at[0, 0].set(1).at[0, 3].set(2)
    node_id = node_id.at[1, 5].set(1).at[1, 2].set(2)
    head_idx = jnp.argmax(node_id == 1, axis=1).astype(jnp.int32)
    tail_idx = jnp.argmax(node_id == 2, axis=1).astype(jnp.int32)

    scores = classifier_forward(repr_nodes, head_idx, tail_idx, node_counts,
                                w_final, b_final)
    scores = jax.block_until_ready(scores)

    # plain-JAX reference of the same head (true-count mean + cat + linear)
    g_out = ((repr_nodes * valid_mask[:, :, None]).sum(axis=1)
             / node_counts[:, None].astype(jnp.float32))                 # (B, D)
    head_h = jnp.take_along_axis(repr_nodes, head_idx[:, None, None], axis=1)[:, 0, :]
    tail_h = jnp.take_along_axis(repr_nodes, tail_idx[:, None, None], axis=1)[:, 0, :]
    pred = jnp.concatenate([g_out, head_h, tail_h], axis=1)              # (B, 3D)
    ref = pred @ w_final + b_final                                       # (B, R)

    assert scores.shape == (B, n_rel)
    assert jnp.allclose(scores, ref, atol=1e-4, rtol=1e-4)
    print("KERNEL_OK")
</pallas_src>

<mosaic_0001>
module attributes {stable_mosaic.version = 11 : i64} {
  func.func @_classifier_kernel(%arg0: i32, %arg1: memref<8x8x128xf32, #tpu.memory_space<vmem>>, %arg2: memref<8x3xi32, #tpu.memory_space<vmem>>, %arg3: memref<384x128xf32, #tpu.memory_space<vmem>>, %arg4: memref<1x128xf32, #tpu.memory_space<vmem>>, %arg5: memref<8x128xf32, #tpu.memory_space<vmem>>) attributes {dimension_semantics = [#tpu.dimension_semantics<parallel>], iteration_bounds = array<i64: 1>, scalar_prefetch = 0 : i64, scratch_operands = 0 : i64, tpu.core_type = #tpu.core_type<tc>, window_params = [{transform_indices = @transform_0, window_bounds = array<i64: 8, 8, 128>}, {transform_indices = @transform_1, window_bounds = array<i64: 8, 3>}, {pipeline_mode = #tpu.pipeline_mode<synchronous>, transform_indices = @transform_2, window_bounds = array<i64: 384, 128>}, {pipeline_mode = #tpu.pipeline_mode<synchronous>, transform_indices = @transform_3, window_bounds = array<i64: 1, 128>}, {transform_indices = @transform_4, window_bounds = array<i64: 8, 128>}]} {
    %c0 = arith.constant 0 : index
    %c0_0 = arith.constant 0 : index
    %c0_1 = arith.constant 0 : index
    %0 = vector.load %arg1[%c0, %c0_0, %c0_1] : memref<8x8x128xf32, #tpu.memory_space<vmem>>, vector<8x8x128xf32>
    %c0_2 = arith.constant 0 : index
    %c0_3 = arith.constant 0 : index
    %1 = vector.load %arg2[%c0_2, %c0_3] : memref<8x3xi32, #tpu.memory_space<vmem>>, vector<8x3xi32>
    %2 = vector.extract_strided_slice %1 {offsets = [0, 0], sizes = [8, 1], strides = [1, 1]} : vector<8x3xi32> to vector<8x1xi32>
    %3 = vector.extract_strided_slice %1 {offsets = [0, 1], sizes = [8, 1], strides = [1, 1]} : vector<8x3xi32> to vector<8x1xi32>
    %4 = vector.extract_strided_slice %1 {offsets = [0, 2], sizes = [8, 1], strides = [1, 1]} : vector<8x3xi32> to vector<8x1xi32>
    %c1_i32 = arith.constant 1 : i32
    %5 = vector.broadcast %c1_i32 : i32 to vector<8x1xi32>
    %6 = arith.maxsi %4, %5 : vector<8x1xi32>
    %7 = tpu.iota {dimensions = array<i32: 1>} : vector<8x8xi32>
    %8 = arith.sitofp %6 : vector<8x1xi32> to vector<8x1xf32>
    %cst = arith.constant 1.000000e+00 : f32
    %9 = vector.broadcast %cst : f32 to vector<8x1xf32>
    %10 = arith.divf %9, %8 : vector<8x1xf32>
    %11 = vector.broadcast %6 : vector<8x1xi32> to vector<8x8xi32>
    %12 = arith.cmpi slt, %7, %11 : vector<8x8xi32>
    %cst_4 = arith.constant 0.000000e+00 : f32
    %13 = vector.shape_cast %10 : vector<8x1xf32> to vector<8x1xf32>
    %14 = vector.broadcast %13 : vector<8x1xf32> to vector<8x8xf32>
    %15 = vector.broadcast %cst_4 : f32 to vector<8x8xf32>
    %16 = arith.select %12, %14, %15 : vector<8x8xi1>, vector<8x8xf32>
    %17 = vector.broadcast %2 : vector<8x1xi32> to vector<8x8xi32>
    %18 = arith.cmpi eq, %7, %17 : vector<8x8xi32>
    %19 = arith.extui %18 : vector<8x8xi1> to vector<8x8xi32>
    %20 = arith.sitofp %19 : vector<8x8xi32> to vector<8x8xf32>
    %21 = vector.broadcast %3 : vector<8x1xi32> to vector<8x8xi32>
    %22 = arith.cmpi eq, %7, %21 : vector<8x8xi32>
    %23 = arith.extui %22 : vector<8x8xi1> to vector<8x8xi32>
    %24 = arith.sitofp %23 : vector<8x8xi32> to vector<8x8xf32>
    %25 = vector.shape_cast %16 : vector<8x8xf32> to vector<8x8x1xf32>
    %26 = vector.broadcast %25 : vector<8x8x1xf32> to vector<8x8x128xf32>
    %27 = arith.mulf %0, %26 : vector<8x8x128xf32>
    %cst_5 = arith.constant dense<0.000000e+00> : vector<8x128xf32>
    %28 = vector.multi_reduction <add>, %27, %cst_5 [1] : vector<8x8x128xf32> to vector<8x128xf32>
    %29 = vector.shape_cast %20 : vector<8x8xf32> to vector<8x8x1xf32>
    %30 = vector.broadcast %29 : vector<8x8x1xf32> to vector<8x8x128xf32>
    %31 = arith.mulf %0, %30 : vector<8x8x128xf32>
    %cst_6 = arith.constant dense<0.000000e+00> : vector<8x128xf32>
    %32 = vector.multi_reduction <add>, %31, %cst_6 [1] : vector<8x8x128xf32> to vector<8x128xf32>
    %33 = vector.shape_cast %24 : vector<8x8xf32> to vector<8x8x1xf32>
    %34 = vector.broadcast %33 : vector<8x8x1xf32> to vector<8x8x128xf32>
    %35 = arith.mulf %0, %34 : vector<8x8x128xf32>
    %cst_7 = arith.constant dense<0.000000e+00> : vector<8x128xf32>
    %36 = vector.multi_reduction <add>, %35, %cst_7 [1] : vector<8x8x128xf32> to vector<8x128xf32>
    %c0_8 = arith.constant 0 : index
    %c0_9 = arith.constant 0 : index
    %37 = vector.load %arg3[%c0_8, %c0_9] : memref<384x128xf32, #tpu.memory_space<vmem>>, vector<128x128xf32>
    %cst_10 = arith.constant dense<0.000000e+00> : vector<8x128xf32>
    %38 = tpu.matmul %28, %37, %cst_10 {dimension_numbers = #tpu.dot_dimension_numbers<[1], [0], [0], [1], [0, 0, 1, 1], [], []>} : vector<8x128xf32>, vector<128x128xf32>, vector<8x128xf32> -> vector<8x128xf32>
    %c128 = arith.constant 128 : index
    %c0_11 = arith.constant 0 : index
    %39 = vector.load %arg3[%c128, %c0_11] : memref<384x128xf32, #tpu.memory_space<vmem>>, vector<128x128xf32>
    %cst_12 = arith.constant dense<0.000000e+00> : vector<8x128xf32>
    %40 = tpu.matmul %32, %39, %cst_12 {dimension_numbers = #tpu.dot_dimension_numbers<[1], [0], [0], [1], [0, 0, 1, 1], [], []>} : vector<8x128xf32>, vector<128x128xf32>, vector<8x128xf32> -> vector<8x128xf32>
    %41 = arith.addf %38, %40 : vector<8x128xf32>
    %c256 = arith.constant 256 : index
    %c0_13 = arith.constant 0 : index
    %42 = vector.load %arg3[%c256, %c0_13] : memref<384x128xf32, #tpu.memory_space<vmem>>, vector<128x128xf32>
    %cst_14 = arith.constant dense<0.000000e+00> : vector<8x128xf32>
    %43 = tpu.matmul %36, %42, %cst_14 {dimension_numbers = #tpu.dot_dimension_numbers<[1], [0], [0], [1], [0, 0, 1, 1], [], []>} : vector<8x128xf32>, vector<128x128xf32>, vector<8x128xf32> -> vector<8x128xf32>
    %44 = arith.addf %41, %43 : vector<8x128xf32>
    %c0_15 = arith.constant 0 : index
    %c0_16 = arith.constant 0 : index
    %45 = vector.load %arg4[%c0_15, %c0_16] : memref<1x128xf32, #tpu.memory_space<vmem>>, vector<1x128xf32>
    %46 = vector.broadcast %45 : vector<1x128xf32> to vector<8x128xf32>
    %47 = arith.addf %44, %46 : vector<8x128xf32>
    %c0_17 = arith.constant 0 : index
    %c0_18 = arith.constant 0 : index
    %48 = vector.load %arg5[%c0_17, %c0_18] : memref<8x128xf32, #tpu.memory_space<vmem>>, vector<8x128xf32>
    tpu.vector_store %arg5[%c0_17, %c0_18], %47 {strides = array<i32>} : memref<8x128xf32, #tpu.memory_space<vmem>>, vector<8x128xf32>,
    return
  }
  func.func @transform_0(%arg0: i32) -> (i32, i32, i32) {
    %c0_i32 = arith.constant 0 : i32
    %c0_i32_0 = arith.constant 0 : i32
    %c0_i32_1 = arith.constant 0 : i32
    return %arg0, %c0_i32, %c0_i32_0 : i32, i32, i32
  }
  func.func @transform_1(%arg0: i32) -> (i32, i32) {
    %c0_i32 = arith.constant 0 : i32
    %c0_i32_0 = arith.constant 0 : i32
    return %arg0, %c0_i32 : i32, i32
  }
  func.func @transform_2(%arg0: i32) -> (i32, i32) {
    %c0_i32 = arith.constant 0 : i32
    %c0_i32_0 = arith.constant 0 : i32
    %c0_i32_1 = arith.constant 0 : i32
    return %c0_i32, %c0_i32_0 : i32, i32
  }
  func.func @transform_3(%arg0: i32) -> (i32, i32) {
    %c0_i32 = arith.constant 0 : i32
    %c0_i32_0 = arith.constant 0 : i32
    %c0_i32_1 = arith.constant 0 : i32
    return %c0_i32, %c0_i32_0 : i32, i32
  }
  func.func @transform_4(%arg0: i32) -> (i32, i32) {
    %c0_i32 = arith.constant 0 : i32
    %c0_i32_0 = arith.constant 0 : i32
    return %arg0, %c0_i32 : i32, i32
  }
}

</mosaic_0001>

<llo_original>
// kernel: tpu_custom_call.1
$region0: #{tpu_custom_call.1}
  #allocation0 [shape = 'u32[]', space=smem, size = 0x4, offset = 0x4, fixed_abs, tag = 'smem constant byte address 0x4 - core index']
  #allocation1 [shape = 'u32[144,128]{1,0:T(1,128)}', space=vmem, size = 0x12000, scoped, tag = 'internal scratch']
  %s0 = inlined_call_operand.hbm [shape: f32[8,8,128], index: 0, kind: input, shape index: {}]
  %s1 = inlined_call_operand.vmem [shape: s32[8,3], index: 1, kind: input, shape index: {}]
  %s2 = inlined_call_operand.hbm [shape: f32[384,128], index: 2, kind: input, shape index: {}]
  %s3 = inlined_call_operand.vmem [shape: f32[1,128], index: 3, kind: input, shape index: {}]
  %s4 = inlined_call_operand.hbm [shape: f32[8,128], index: 4, kind: output, shape index: {}]
  %s5 = sld [smem:[#allocation0]]
  $region34: #{tpu_custom_call.1} parent=0
    _
  %s7 = ssub.s32 1, %s5
  %s8 = scalar_select 0, %s7, %s5
  $region1: #{tpu_custom_call.1} parent=0
    #allocation2 [shape = 'u8[32768]{0}', space=vmem, size = 0x8000, scoped, tag = 'input window, operand 0, single buffered']
    #allocation3 [shape = 's32[1]{0}', space=sflag, size = 0x4, scoped, tag = 'scoped memory for tpu_custom_call.1']
    #allocation4 [shape = 's32[1]{0}', space=sflag, size = 0x4, scoped, tag = 'scoped memory for tpu_custom_call.1']
    #allocation5 [shape = 'u8[196608]{0}', space=vmem, size = 0x30000, scoped, tag = 'input window, operand 2, single buffered']
    #allocation6 [shape = 's32[1]{0}', space=sflag, size = 0x4, scoped, tag = 'scoped memory for tpu_custom_call.1']
    #allocation7 [shape = 'u8[4096]{0}', space=vmem, size = 0x1000, scoped, tag = 'output window, operand 0, single buffered']
    %9 = vsyncpa [#allocation3], 0
    %10 = vsyncpa [#allocation6], 0
    %11 = vsyncpa [#allocation4], 0
    // Predicated region
    $region2: #{tpu_custom_call.1} parent=1 // pred_check
      _
    $region3: #{tpu_custom_call.1} parent=1 // pred_check_branch
      %13 = sbr.rel (0) target = $region5
    $region4: #{tpu_custom_call.1} parent=1 // pred_region
      %s15 = ssub.s32 1024, 1024
      %16 = vsyncadd [#allocation3], %s15
      %s17 = sshll.u32 [#allocation2], 4
      %s18 = int_to_ptr.vmem [resolvable:$true] %s17
      %23 = dma.hbm_to_vmem [thread:$0]  %s0, 1024, %s18, [#allocation3], 128, 128, 8
    $region5: #{tpu_custom_call.1} parent=1 // pred_fallthru
      _
    // Predicated region
    $region6: #{tpu_custom_call.1} parent=1 // pred_check
      _
    $region7: #{tpu_custom_call.1} parent=1 // pred_check_branch
      %25 = sbr.rel (0) target = $region9
    $region8: #{tpu_custom_call.1} parent=1 // pred_region
      _
    $region9: #{tpu_custom_call.1} parent=1 // pred_fallthru
      _
    // Predicated region
    $region10: #{tpu_custom_call.1} parent=1 // pred_check
      _
    $region11: #{tpu_custom_call.1} parent=1 // pred_check_branch
      %27 = sbr.rel (0) target = $region13
    $region12: #{tpu_custom_call.1} parent=1 // pred_region
      %s29 = ssub.s32 6144, 6144
      %30 = vsyncadd [#allocation6], %s29
      %s31 = sshll.u32 [#allocation5], 4
      %s32 = int_to_ptr.vmem [resolvable:$true] %s31
      %37 = dma.hbm_to_vmem [thread:$0]  %s2, 6144, %s32, [#allocation6], 128, 128, 8
    $region13: #{tpu_custom_call.1} parent=1 // pred_fallthru
      _
    // Predicated region
    $region14: #{tpu_custom_call.1} parent=1 // pred_check
      _
    $region15: #{tpu_custom_call.1} parent=1 // pred_check_branch
      %39 = sbr.rel (0) target = $region17
    $region16: #{tpu_custom_call.1} parent=1 // pred_region
      _
    $region17: #{tpu_custom_call.1} parent=1 // pred_fallthru
      _
    // Predicated region
    $region18: #{tpu_custom_call.1} parent=1 // pred_check
      _
    $region19: #{tpu_custom_call.1} parent=1 // pred_check_branch
      %41 = sbr.rel (0) target = $region21
    $region20: #{tpu_custom_call.1} parent=1 // pred_region
      %42 = dma.done [#allocation3], 1024
    $region21: #{tpu_custom_call.1} parent=1 // pred_fallthru
      _
    // Predicated region
    $region22: #{tpu_custom_call.1} parent=1 // pred_check
      _
    $region23: #{tpu_custom_call.1} parent=1 // pred_check_branch
      %44 = sbr.rel (0) target = $region25
    $region24: #{tpu_custom_call.1} parent=1 // pred_region
      %45 = dma.done [#allocation6], 6144
    $region25: #{tpu_custom_call.1} parent=1 // pred_fallthru
      _
    %v46 = vld [vmem:[#allocation2] sm:$0xff]
    %v47 = vld [vmem:[#allocation2 + $0x8] sm:$0xff]
    %v48 = vld [vmem:[#allocation2 + $0x10] sm:$0xff]
    %v49 = vld [vmem:[#allocation2 + $0x18] sm:$0xff]
    %v50 = vld [vmem:[#allocation2 + $0x20] sm:$0xff]
    %v51 = vld [vmem:[#allocation2 + $0x28] sm:$0xff]
    %v52 = vld [vmem:[#allocation2 + $0x30] sm:$0xff]
    %v53 = vld [vmem:[#allocation2 + $0x38] sm:$0xff]
    %v54 = vld [vmem:[%s1] sm:$0xff]
    %vm55 = vcmp.gt.s32.totalorder %v54, 1
    %v56 = vsel %vm55, %v54, 1
    %v57 = vlaneseq
    %v58 = vand.u32 %v57, 127
    %v59 = vcvt.s32.f32 %v56
    %v60 = vrcp.pop %v59
    %v61 = vmul.f32 1.0, %v60
    %62 = vset.pattern.permute.xlu0 2
    %63 = vperm.xlu0 %62, %v56
    %v64 = vpop.permute.xlu0 %63
    %vm65 = vcmp.lt.s32.totalorder %v58, %v64
    %67 = vset.pattern.permute.xlu0 2
    %68 = vperm.xlu0 %67, %v61
    %v69 = vpop.permute.xlu0 %68
    %v71 = vsel %vm65, %v69, 0.0
    %72 = vset.pattern.permute.xlu0 0
    %73 = vperm.xlu0 %72, %v54
    %v74 = vpop.permute.xlu0 %73
    %vm75 = vcmp.eq.s32.totalorder %v58, %v74
    %v76 = vsel %vm75, 1, 0
    %v77 = vcvt.s32.f32 %v76
    %78 = vset.pattern.permute.xlu0 1
    %79 = vperm.xlu0 %78, %v54
    %v80 = vpop.permute.xlu0 %79
    %vm81 = vcmp.eq.s32.totalorder %v58, %v80
    %v82 = vsel %vm81, 1, 0
    %v83 = vcvt.s32.f32 %v82
    %v84 = vlaneseq
    %v85 = vshrl.u32 %v84, 7
    %v86 = vsub.s32 0, %v85
    %v87 = vrot.slane %v71, %v86
    %89 = vbcast.lane.b32.xlu0 %v87, 256
    %v90 = vpop.permute.xlu0 %89
    %v91 = vlaneseq
    %v92 = vshrl.u32 %v91, 7
    %v93 = vsub.s32 1, %v92
    %v94 = vrot.slane %v71, %v93
    %96 = vbcast.lane.b32.xlu0 %v94, 256
    %v97 = vpop.permute.xlu0 %96
    %v98 = vlaneseq
    %v99 = vshrl.u32 %v98, 7
    %v100 = vsub.s32 2, %v99
    %v101 = vrot.slane %v71, %v100
    %103 = vbcast.lane.b32.xlu0 %v101, 256
    %v104 = vpop.permute.xlu0 %103
    %v105 = vlaneseq
    %v106 = vshrl.u32 %v105, 7
    %v107 = vsub.s32 3, %v106
    %v108 = vrot.slane %v71, %v107
    %110 = vbcast.lane.b32.xlu0 %v108, 256
    %v111 = vpop.permute.xlu0 %110
    %v112 = vlaneseq
    %v113 = vshrl.u32 %v112, 7
    %v114 = vsub.s32 4, %v113
    %v115 = vrot.slane %v71, %v114
    %117 = vbcast.lane.b32.xlu0 %v115, 256
    %v118 = vpop.permute.xlu0 %117
    %v119 = vlaneseq
    %v120 = vshrl.u32 %v119, 7
    %v121 = vsub.s32 5, %v120
    %v122 = vrot.slane %v71, %v121
    %124 = vbcast.lane.b32.xlu0 %v122, 256
    %v125 = vpop.permute.xlu0 %124
    %v126 = vlaneseq
    %v127 = vshrl.u32 %v126, 7
    %v128 = vsub.s32 6, %v127
    %v129 = vrot.slane %v71, %v128
    %131 = vbcast.lane.b32.xlu0 %v129, 256
    %v132 = vpop.permute.xlu0 %131
    %v133 = vlaneseq
    %v134 = vshrl.u32 %v133, 7
    %v135 = vsub.s32 7, %v134
    %v136 = vrot.slane %v71, %v135
    %138 = vbcast.lane.b32.xlu0 %v136, 256
    %v139 = vpop.permute.xlu0 %138
    %v140 = vmul.f32 %v46, %v90
    %v141 = vmul.f32 %v47, %v97
    %v142 = vmul.f32 %v48, %v104
    %v143 = vmul.f32 %v49, %v111
    %v144 = vmul.f32 %v50, %v118
    %v145 = vmul.f32 %v51, %v125
    %v146 = vmul.f32 %v52, %v132
    %v147 = vmul.f32 %v53, %v139
    %v148 = vrot.slane %v140, 4
    %v149 = vadd.f32 %v140, %v148
    %v150 = vrot.slane %v149, 2
    %v151 = vadd.f32 %v149, %v150
    %v152 = vrot.slane %v151, 1
    %v153 = vadd.f32 %v151, %v152
    %v154 = vrot.slane %v141, 4
    %v155 = vadd.f32 %v141, %v154
    %v156 = vrot.slane %v155, 2
    %v157 = vadd.f32 %v155, %v156
    %v158 = vrot.slane %v157, 1
    %v159 = vadd.f32 %v157, %v158
    %v160 = vrot.slane %v142, 4
    %v161 = vadd.f32 %v142, %v160
    %v162 = vrot.slane %v161, 2
    %v163 = vadd.f32 %v161, %v162
    %v164 = vrot.slane %v163, 1
    %v165 = vadd.f32 %v163, %v164
    %v166 = vrot.slane %v143, 4
    %v167 = vadd.f32 %v143, %v166
    %v168 = vrot.slane %v167, 2
    %v169 = vadd.f32 %v167, %v168
    %v170 = vrot.slane %v169, 1
    %v171 = vadd.f32 %v169, %v170
    %v172 = vrot.slane %v144, 4
    %v173 = vadd.f32 %v144, %v172
    %v174 = vrot.slane %v173, 2
    %v175 = vadd.f32 %v173, %v174
    %v176 = vrot.slane %v175, 1
    %v177 = vadd.f32 %v175, %v176
    %v178 = vrot.slane %v145, 4
    %v179 = vadd.f32 %v145, %v178
    %v180 = vrot.slane %v179, 2
    %v181 = vadd.f32 %v179, %v180
    %v182 = vrot.slane %v181, 1
    %v183 = vadd.f32 %v181, %v182
    %v184 = vrot.slane %v146, 4
    %v185 = vadd.f32 %v146, %v184
    %v186 = vrot.slane %v185, 2
    %v187 = vadd.f32 %v185, %v186
    %v188 = vrot.slane %v187, 1
    %v189 = vadd.f32 %v187, %v188
    %v190 = vrot.slane %v147, 4
    %v191 = vadd.f32 %v147, %v190
    %v192 = vrot.slane %v191, 2
    %v193 = vadd.f32 %v191, %v192
    %v194 = vrot.slane %v193, 1
    %v195 = vadd.f32 %v193, %v194
    %v196 = vlaneseq
    %v197 = vshrl.u32 %v196, 7
    %v198 = vsub.s32 0, %v197
    %v199 = vrot.slane %v77, %v198
    %201 = vbcast.lane.b32.xlu0 %v199, 256
    %v202 = vpop.permute.xlu0 %201
    %v203 = vlaneseq
    %v204 = vshrl.u32 %v203, 7
    %v205 = vsub.s32 1, %v204
    %v206 = vrot.slane %v77, %v205
    %208 = vbcast.lane.b32.xlu0 %v206, 256
    %v209 = vpop.permute.xlu0 %208
    %v210 = vlaneseq
    %v211 = vshrl.u32 %v210, 7
    %v212 = vsub.s32 2, %v211
    %v213 = vrot.slane %v77, %v212
    %215 = vbcast.lane.b32.xlu0 %v213, 256
    %v216 = vpop.permute.xlu0 %215
    %v217 = vlaneseq
    %v218 = vshrl.u32 %v217, 7
    %v219 = vsub.s32 3, %v218
    %v220 = vrot.slane %v77, %v219
    %222 = vbcast.lane.b32.xlu0 %v220, 256
    %v223 = vpop.permute.xlu0 %222
    %v224 = vlaneseq
    %v225 = vshrl.u32 %v224, 7
    %v226 = vsub.s32 4, %v225
    %v227 = vrot.slane %v77, %v226
    %229 = vbcast.lane.b32.xlu0 %v227, 256
    %v230 = vpop.permute.xlu0 %229
    %v231 = vlaneseq
    %v232 = vshrl.u32 %v231, 7
    %v233 = vsub.s32 5, %v232
    %v234 = vrot.slane %v77, %v233
    %236 = vbcast.lane.b32.xlu0 %v234, 256
    %v237 = vpop.permute.xlu0 %236
    %v238 = vlaneseq
    %v239 = vshrl.u32 %v238, 7
    %v240 = vsub.s32 6, %v239
    %v241 = vrot.slane %v77, %v240
    %243 = vbcast.lane.b32.xlu0 %v241, 256
    %v244 = vpop.permute.xlu0 %243
    %v245 = vlaneseq
    %v246 = vshrl.u32 %v245, 7
    %v247 = vsub.s32 7, %v246
    %v248 = vrot.slane %v77, %v247
    %250 = vbcast.lane.b32.xlu0 %v248, 256
    %v251 = vpop.permute.xlu0 %250
    %v252 = vmul.f32 %v46, %v202
    %v253 = vmul.f32 %v47, %v209
    %v254 = vmul.f32 %v48, %v216
    %v255 = vmul.f32 %v49, %v223
    %v256 = vmul.f32 %v50, %v230
    %v257 = vmul.f32 %v51, %v237
    %v258 = vmul.f32 %v52, %v244
    %v259 = vmul.f32 %v53, %v251
    %v260 = vrot.slane %v252, 4
    %v261 = vadd.f32 %v252, %v260
    %v262 = vrot.slane %v261, 2
    %v263 = vadd.f32 %v261, %v262
    %v264 = vrot.slane %v263, 1
    %v265 = vadd.f32 %v263, %v264
    %v266 = vrot.slane %v253, 4
    %v267 = vadd.f32 %v253, %v266
    %v268 = vrot.slane %v267, 2
    %v269 = vadd.f32 %v267, %v268
    %v270 = vrot.slane %v269, 1
    %v271 = vadd.f32 %v269, %v270
    %v272 = vrot.slane %v254, 4
    %v273 = vadd.f32 %v254, %v272
    %v274 = vrot.slane %v273, 2
    %v275 = vadd.f32 %v273, %v274
    %v276 = vrot.slane %v275, 1
    %v277 = vadd.f32 %v275, %v276
    %v278 = vrot.slane %v255, 4
    %v279 = vadd.f32 %v255, %v278
    %v280 = vrot.slane %v279, 2
    %v281 = vadd.f32 %v279, %v280
    %v282 = vrot.slane %v281, 1
    %v283 = vadd.f32 %v281, %v282
    %v284 = vrot.slane %v256, 4
    %v285 = vadd.f32 %v256, %v284
    %v286 = vrot.slane %v285, 2
    %v287 = vadd.f32 %v285, %v286
    %v288 = vrot.slane %v287, 1
    %v289 = vadd.f32 %v287, %v288
    %v290 = vrot.slane %v257, 4
    %v291 = vadd.f32 %v257, %v290
    %v292 = vrot.slane %v291, 2
    %v293 = vadd.f32 %v291, %v292
    %v294 = vrot.slane %v293, 1
    %v295 = vadd.f32 %v293, %v294
    %v296 = vrot.slane %v258, 4
    %v297 = vadd.f32 %v258, %v296
    %v298 = vrot.slane %v297, 2
    %v299 = vadd.f32 %v297, %v298
    %v300 = vrot.slane %v299, 1
    %v301 = vadd.f32 %v299, %v300
    %v302 = vrot.slane %v259, 4
    %v303 = vadd.f32 %v259, %v302
    %v304 = vrot.slane %v303, 2
    %v305 = vadd.f32 %v303, %v304
    %v306 = vrot.slane %v305, 1
    %v307 = vadd.f32 %v305, %v306
    %v308 = vlaneseq
    %v309 = vshrl.u32 %v308, 7
    %v310 = vsub.s32 0, %v309
    %v311 = vrot.slane %v83, %v310
    %313 = vbcast.lane.b32.xlu0 %v311, 256
    %v314 = vpop.permute.xlu0 %313
    %v315 = vlaneseq
    %v316 = vshrl.u32 %v315, 7
    %v317 = vsub.s32 1, %v316
    %v318 = vrot.slane %v83, %v317
    %320 = vbcast.lane.b32.xlu0 %v318, 256
    %v321 = vpop.permute.xlu0 %320
    %v322 = vlaneseq
    %v323 = vshrl.u32 %v322, 7
    %v324 = vsub.s32 2, %v323
    %v325 = vrot.slane %v83, %v324
    %327 = vbcast.lane.b32.xlu0 %v325, 256
    %v328 = vpop.permute.xlu0 %327
    %v329 = vlaneseq
    %v330 = vshrl.u32 %v329, 7
    %v331 = vsub.s32 3, %v330
    %v332 = vrot.slane %v83, %v331
    %334 = vbcast.lane.b32.xlu0 %v332, 256
    %v335 = vpop.permute.xlu0 %334
    %v336 = vlaneseq
    %v337 = vshrl.u32 %v336, 7
    %v338 = vsub.s32 4, %v337
    %v339 = vrot.slane %v83, %v338
    %341 = vbcast.lane.b32.xlu0 %v339, 256
    %v342 = vpop.permute.xlu0 %341
    %v343 = vlaneseq
    %v344 = vshrl.u32 %v343, 7
    %v345 = vsub.s32 5, %v344
    %v346 = vrot.slane %v83, %v345
    %348 = vbcast.lane.b32.xlu0 %v346, 256
    %v349 = vpop.permute.xlu0 %348
    %v350 = vlaneseq
    %v351 = vshrl.u32 %v350, 7
    %v352 = vsub.s32 6, %v351
    %v353 = vrot.slane %v83, %v352
    %355 = vbcast.lane.b32.xlu0 %v353, 256
    %v356 = vpop.permute.xlu0 %355
    %v357 = vlaneseq
    %v358 = vshrl.u32 %v357, 7
    %v359 = vsub.s32 7, %v358
    %v360 = vrot.slane %v83, %v359
    %362 = vbcast.lane.b32.xlu0 %v360, 256
    %v363 = vpop.permute.xlu0 %362
    %v364 = vmul.f32 %v46, %v314
    %v365 = vmul.f32 %v47, %v321
    %v366 = vmul.f32 %v48, %v328
    %v367 = vmul.f32 %v49, %v335
    %v368 = vmul.f32 %v50, %v342
    %v369 = vmul.f32 %v51, %v349
    %v370 = vmul.f32 %v52, %v356
    %v371 = vmul.f32 %v53, %v363
    %v372 = vrot.slane %v364, 4
    %v373 = vadd.f32 %v364, %v372
    %v374 = vrot.slane %v373, 2
    %v375 = vadd.f32 %v373, %v374
    %v376 = vrot.slane %v375, 1
    %v377 = vadd.f32 %v375, %v376
    %v378 = vrot.slane %v365, 4
    %v379 = vadd.f32 %v365, %v378
    %v380 = vrot.slane %v379, 2
    %v381 = vadd.f32 %v379, %v380
    %v382 = vrot.slane %v381, 1
    %v383 = vadd.f32 %v381, %v382
    %v384 = vrot.slane %v366, 4
    %v385 = vadd.f32 %v366, %v384
    %v386 = vrot.slane %v385, 2
    %v387 = vadd.f32 %v385, %v386
    %v388 = vrot.slane %v387, 1
    %v389 = vadd.f32 %v387, %v388
    %v390 = vrot.slane %v367, 4
    %v391 = vadd.f32 %v367, %v390
    %v392 = vrot.slane %v391, 2
    %v393 = vadd.f32 %v391, %v392
    %v394 = vrot.slane %v393, 1
    %v395 = vadd.f32 %v393, %v394
    %v396 = vrot.slane %v368, 4
    %v397 = vadd.f32 %v368, %v396
    %v398 = vrot.slane %v397, 2
    %v399 = vadd.f32 %v397, %v398
    %v400 = vrot.slane %v399, 1
    %v401 = vadd.f32 %v399, %v400
    %v402 = vrot.slane %v369, 4
    %v403 = vadd.f32 %v369, %v402
    %v404 = vrot.slane %v403, 2
    %v405 = vadd.f32 %v403, %v404
    %v406 = vrot.slane %v405, 1
    %v407 = vadd.f32 %v405, %v406
    %v408 = vrot.slane %v370, 4
    %v409 = vadd.f32 %v370, %v408
    %v410 = vrot.slane %v409, 2
    %v411 = vadd.f32 %v409, %v410
    %v412 = vrot.slane %v411, 1
    %v413 = vadd.f32 %v411, %v412
    %v414 = vrot.slane %v371, 4
    %v415 = vadd.f32 %v371, %v414
    %v416 = vrot.slane %v415, 2
    %v417 = vadd.f32 %v415, %v416
    %v418 = vrot.slane %v417, 1
    %v419 = vadd.f32 %v417, %v418
    %v420 = vld [vmem:[#allocation5] sm:$0xff]
    %v421 = vld [vmem:[#allocation5 + $0x8] sm:$0xff]
    %v422 = vld [vmem:[#allocation5 + $0x10] sm:$0xff]
    %v423 = vld [vmem:[#allocation5 + $0x18] sm:$0xff]
    %v424 = vld [vmem:[#allocation5 + $0x20] sm:$0xff]
    %v425 = vld [vmem:[#allocation5 + $0x28] sm:$0xff]
    %v426 = vld [vmem:[#allocation5 + $0x30] sm:$0xff]
    %v427 = vld [vmem:[#allocation5 + $0x38] sm:$0xff]
    %v428 = vld [vmem:[#allocation5 + $0x40] sm:$0xff]
    %v429 = vld [vmem:[#allocation5 + $0x48] sm:$0xff]
    %v430 = vld [vmem:[#allocation5 + $0x50] sm:$0xff]
    %v431 = vld [vmem:[#allocation5 + $0x58] sm:$0xff]
    %v432 = vld [vmem:[#allocation5 + $0x60] sm:$0xff]
    %v433 = vld [vmem:[#allocation5 + $0x68] sm:$0xff]
    %v434 = vld [vmem:[#allocation5 + $0x70] sm:$0xff]
    %v435 = vld [vmem:[#allocation5 + $0x78] sm:$0xff]
    %v436 = vld [vmem:[#allocation5 + $0x80] sm:$0xff]
    %v437 = vld [vmem:[#allocation5 + $0x88] sm:$0xff]
    %v438 = vld [vmem:[#allocation5 + $0x90] sm:$0xff]
    %v439 = vld [vmem:[#allocation5 + $0x98] sm:$0xff]
    %v440 = vld [vmem:[#allocation5 + $0xa0] sm:$0xff]
    %v441 = vld [vmem:[#allocation5 + $0xa8] sm:$0xff]
    %v442 = vld [vmem:[#allocation5 + $0xb0] sm:$0xff]
    %v443 = vld [vmem:[#allocation5 + $0xb8] sm:$0xff]
    %v444 = vld [vmem:[#allocation5 + $0xc0] sm:$0xff]
    %v445 = vld [vmem:[#allocation5 + $0xc8] sm:$0xff]
    %v446 = vld [vmem:[#allocation5 + $0xd0] sm:$0xff]
    %v447 = vld [vmem:[#allocation5 + $0xd8] sm:$0xff]
    %v448 = vld [vmem:[#allocation5 + $0xe0] sm:$0xff]
    %v449 = vld [vmem:[#allocation5 + $0xe8] sm:$0xff]
    %v450 = vld [vmem:[#allocation5 + $0xf0] sm:$0xff]
    %v451 = vld [vmem:[#allocation5 + $0xf8] sm:$0xff]
    %vm460 = vcmask 1041409
    %v461 = vsel %vm460, %v271, %v265
    %vm462 = vcmask 1042434
    %v463 = vsel %vm462, %v277, %v461
    %vm464 = vcmask 1043459
    %v465 = vsel %vm464, %v283, %v463
    %vm466 = vcmask 1044484
    %v467 = vsel %vm466, %v289, %v465
    %vm468 = vcmask 1045509
    %v469 = vsel %vm468, %v295, %v467
    %vm470 = vcmask 1046534
    %v471 = vsel %vm470, %v301, %v469
    %vm472 = vcmask 1047559
    %v473 = vsel %vm472, %v307, %v471
    %475 = vmatprep.subr.mxu0 0.0
    %476 = vmatpush1.msra.mxu0 %v451
    %477 = vmatprep.subr.mxu0 0.0
    %478 = vmatpush1.msra.mxu0 %v450
    %479 = vmatprep.subr.mxu0 0.0
    %480 = vmatpush1.msra.mxu0 %v449
    %481 = vmatprep.subr.mxu0 0.0
    %482 = vmatpush1.msra.mxu0 %v448
    %483 = vmatprep.subr.mxu0 0.0
    %484 = vmatpush1.msra.mxu0 %v447
    %485 = vmatprep.subr.mxu0 0.0
    %486 = vmatpush1.msra.mxu0 %v446
    %487 = vmatprep.subr.mxu0 0.0
    %488 = vmatpush1.msra.mxu0 %v445
    %489 = vmatprep.subr.mxu0 0.0
    %490 = vmatpush1.msra.mxu0 %v444
    %491 = vmatprep.subr.mxu0 0.0
    %492 = vmatpush1.msra.mxu0 %v443
    %493 = vmatprep.subr.mxu0 0.0
    %494 = vmatpush1.msra.mxu0 %v442
    %495 = vmatprep.subr.mxu0 0.0
    %496 = vmatpush1.msra.mxu0 %v441
    %497 = vmatprep.subr.mxu0 0.0
    %498 = vmatpush1.msra.mxu0 %v440
    %499 = vmatprep.subr.mxu0 0.0
    %500 = vmatpush1.msra.mxu0 %v439
    %501 = vmatprep.subr.mxu0 0.0
    %502 = vmatpush1.msra.mxu0 %v438
    %503 = vmatprep.subr.mxu0 0.0
    %504 = vmatpush1.msra.mxu0 %v437
    %505 = vmatprep.subr.mxu0 0.0
    %506 = vmatpush1.msra.mxu0 %v436
    %507 = vmatprep.subr.mxu0 0.0
    %508 = vmatpush2.msra.mxu0 0.0
    %509 = vmatprep.subr.mxu0 0.0
    %510 = vmatpush2.msra.mxu0 0.0
    %511 = vmatprep.subr.mxu0 0.0
    %512 = vmatpush2.msra.mxu0 0.0
    %513 = vmatprep.subr.mxu0 0.0
    %514 = vmatpush2.msra.mxu0 0.0
    %515 = vmatprep.subr.mxu0 0.0
    %516 = vmatpush2.msra.mxu0 0.0
    %517 = vmatprep.subr.mxu0 0.0
    %518 = vmatpush2.msra.mxu0 0.0
    %519 = vmatprep.subr.mxu0 0.0
    %520 = vmatpush2.msra.mxu0 0.0
    %521 = vmatprep.subr.mxu0 0.0
    %522 = vmatpush2.msra.mxu0 0.0
    %523 = vmatprep.subr.mxu0 0.0
    %524 = vmatpush2.msra.mxu0 0.0
    %525 = vmatprep.subr.mxu0 0.0
    %526 = vmatpush2.msra.mxu0 0.0
    %527 = vmatprep.subr.mxu0 0.0
    %528 = vmatpush2.msra.mxu0 0.0
    %529 = vmatprep.subr.mxu0 0.0
    %530 = vmatpush2.msra.mxu0 0.0
    %531 = vmatprep.subr.mxu0 0.0
    %532 = vmatpush2.msra.mxu0 0.0
    %533 = vmatprep.subr.mxu0 0.0
    %534 = vmatpush2.msra.mxu0 0.0
    %535 = vmatprep.subr.mxu0 0.0
    %536 = vmatpush2.msra.mxu0 0.0
    %537 = vmatprep.subr.mxu0 0.0
    %538 = vmatpush2.msra.mxu0 0.0
    %539 = vmatprep.mubr.f32.mxu0 0.0
    %540 = vmatmul.mubr.f32.gmra.mxu0 %v473
    %v541 = vpop.f32.mrf.mxu0
    %v542 = vadd.f32 0.0, %v541
    %v543 = vpop.f32.mrf.mxu0
    %544 = vdwg.mxu0
    %v553 = vsel %vm460, %v159, %v153
    %v554 = vsel %vm462, %v165, %v553
    %v555 = vsel %vm464, %v171, %v554
    %v556 = vsel %vm466, %v177, %v555
    %v557 = vsel %vm468, %v183, %v556
    %v558 = vsel %vm470, %v189, %v557
    %v559 = vsel %vm472, %v195, %v558
    %561 = vmatprep.subr.mxu0 0.0
    %562 = vmatpush1.msra.mxu0 %v435
    %563 = vmatprep.subr.mxu0 0.0
    %564 = vmatpush1.msra.mxu0 %v434
    %565 = vmatprep.subr.mxu0 0.0
    %566 = vmatpush1.msra.mxu0 %v433
    %567 = vmatprep.subr.mxu0 0.0
    %568 = vmatpush1.msra.mxu0 %v432
    %569 = vmatprep.subr.mxu0 0.0
    %570 = vmatpush1.msra.mxu0 %v431
    %571 = vmatprep.subr.mxu0 0.0
    %572 = vmatpush1.msra.mxu0 %v430
    %573 = vmatprep.subr.mxu0 0.0
    %574 = vmatpush1.msra.mxu0 %v429
    %575 = vmatprep.subr.mxu0 0.0
    %576 = vmatpush1.msra.mxu0 %v428
    %577 = vmatprep.subr.mxu0 0.0
    %578 = vmatpush1.msra.mxu0 %v427
    %579 = vmatprep.subr.mxu0 0.0
    %580 = vmatpush1.msra.mxu0 %v426
    %581 = vmatprep.subr.mxu0 0.0
    %582 = vmatpush1.msra.mxu0 %v425
    %583 = vmatprep.subr.mxu0 0.0
    %584 = vmatpush1.msra.mxu0 %v424
    %585 = vmatprep.subr.mxu0 0.0
    %586 = vmatpush1.msra.mxu0 %v423
    %587 = vmatprep.subr.mxu0 0.0
    %588 = vmatpush1.msra.mxu0 %v422
    %589 = vmatprep.subr.mxu0 0.0
    %590 = vmatpush1.msra.mxu0 %v421
    %591 = vmatprep.subr.mxu0 0.0
    %592 = vmatpush1.msra.mxu0 %v420
    %593 = vmatprep.subr.mxu0 0.0
    %594 = vmatpush2.msra.mxu0 0.0
    %595 = vmatprep.subr.mxu0 0.0
    %596 = vmatpush2.msra.mxu0 0.0
    %597 = vmatprep.subr.mxu0 0.0
    %598 = vmatpush2.msra.mxu0 0.0
    %599 = vmatprep.subr.mxu0 0.0
    %600 = vmatpush2.msra.mxu0 0.0
    %601 = vmatprep.subr.mxu0 0.0
    %602 = vmatpush2.msra.mxu0 0.0
    %603 = vmatprep.subr.mxu0 0.0
    %604 = vmatpush2.msra.mxu0 0.0
    %605 = vmatprep.subr.mxu0 0.0
    %606 = vmatpush2.msra.mxu0 0.0
    %607 = vmatprep.subr.mxu0 0.0
    %608 = vmatpush2.msra.mxu0 0.0
    %609 = vmatprep.subr.mxu0 0.0
    %610 = vmatpush2.msra.mxu0 0.0
    %611 = vmatprep.subr.mxu0 0.0
    %612 = vmatpush2.msra.mxu0 0.0
    %613 = vmatprep.subr.mxu0 0.0
    %614 = vmatpush2.msra.mxu0 0.0
    %615 = vmatprep.subr.mxu0 0.0
    %616 = vmatpush2.msra.mxu0 0.0
    %617 = vmatprep.subr.mxu0 0.0
    %618 = vmatpush2.msra.mxu0 0.0
    %619 = vmatprep.subr.mxu0 0.0
    %620 = vmatpush2.msra.mxu0 0.0
    %621 = vmatprep.subr.mxu0 0.0
    %622 = vmatpush2.msra.mxu0 0.0
    %623 = vmatprep.subr.mxu0 0.0
    %624 = vmatpush2.msra.mxu0 0.0
    %625 = vmatprep.mubr.f32.mxu0 0.0
    %626 = vmatmul.mubr.f32.gmra.mxu0 %v559
    %v627 = vpop.f32.mrf.mxu0
    %v628 = vadd.f32 %v542, %v627
    %v629 = vpop.f32.mrf.mxu0
    %630 = vdwg.mxu0
    %v631 = vld [vmem:[#allocation5 + $0x100] sm:$0xff]
    %v632 = vld [vmem:[#allocation5 + $0x108] sm:$0xff]
    %v633 = vld [vmem:[#allocation5 + $0x110] sm:$0xff]
    %v634 = vld [vmem:[#allocation5 + $0x118] sm:$0xff]
    %v635 = vld [vmem:[#allocation5 + $0x120] sm:$0xff]
    %v636 = vld [vmem:[#allocation5 + $0x128] sm:$0xff]
    %v637 = vld [vmem:[#allocation5 + $0x130] sm:$0xff]
    %v638 = vld [vmem:[#allocation5 + $0x138] sm:$0xff]
    %v639 = vld [vmem:[#allocation5 + $0x140] sm:$0xff]
    %v640 = vld [vmem:[#allocation5 + $0x148] sm:$0xff]
    %v641 = vld [vmem:[#allocation5 + $0x150] sm:$0xff]
    %v642 = vld [vmem:[#allocation5 + $0x158] sm:$0xff]
    %v643 = vld [vmem:[#allocation5 + $0x160] sm:$0xff]
    %v644 = vld [vmem:[#allocation5 + $0x168] sm:$0xff]
    %v645 = vld [vmem:[#allocation5 + $0x170] sm:$0xff]
    %v646 = vld [vmem:[#allocation5 + $0x178] sm:$0xff]
    %v655 = vsel %vm460, %v383, %v377
    %v656 = vsel %vm462, %v389, %v655
    %v657 = vsel %vm464, %v395, %v656
    %v658 = vsel %vm466, %v401, %v657
    %v659 = vsel %vm468, %v407, %v658
    %v660 = vsel %vm470, %v413, %v659
    %v661 = vsel %vm472, %v419, %v660
    %663 = vmatprep.subr.mxu0 0.0
    %664 = vmatpush1.msra.mxu0 %v646
    %665 = vmatprep.subr.mxu0 0.0
    %666 = vmatpush1.msra.mxu0 %v645
    %667 = vmatprep.subr.mxu0 0.0
    %668 = vmatpush1.msra.mxu0 %v644
    %669 = vmatprep.subr.mxu0 0.0
    %670 = vmatpush1.msra.mxu0 %v643
    %671 = vmatprep.subr.mxu0 0.0
    %672 = vmatpush1.msra.mxu0 %v642
    %673 = vmatprep.subr.mxu0 0.0
    %674 = vmatpush1.msra.mxu0 %v641
    %675 = vmatprep.subr.mxu0 0.0
    %676 = vmatpush1.msra.mxu0 %v640
    %677 = vmatprep.subr.mxu0 0.0
    %678 = vmatpush1.msra.mxu0 %v639
    %679 = vmatprep.subr.mxu0 0.0
    %680 = vmatpush1.msra.mxu0 %v638
    %681 = vmatprep.subr.mxu0 0.0
    %682 = vmatpush1.msra.mxu0 %v637
    %683 = vmatprep.subr.mxu0 0.0
    %684 = vmatpush1.msra.mxu0 %v636
    %685 = vmatprep.subr.mxu0 0.0
    %686 = vmatpush1.msra.mxu0 %v635
    %687 = vmatprep.subr.mxu0 0.0
    %688 = vmatpush1.msra.mxu0 %v634
    %689 = vmatprep.subr.mxu0 0.0
    %690 = vmatpush1.msra.mxu0 %v633
    %691 = vmatprep.subr.mxu0 0.0
    %692 = vmatpush1.msra.mxu0 %v632
    %693 = vmatprep.subr.mxu0 0.0
    %694 = vmatpush1.msra.mxu0 %v631
    %695 = vmatprep.subr.mxu0 0.0
    %696 = vmatpush2.msra.mxu0 0.0
    %697 = vmatprep.subr.mxu0 0.0
    %698 = vmatpush2.msra.mxu0 0.0
    %699 = vmatprep.subr.mxu0 0.0
    %700 = vmatpush2.msra.mxu0 0.0
    %701 = vmatprep.subr.mxu0 0.0
    %702 = vmatpush2.msra.mxu0 0.0
    %703 = vmatprep.subr.mxu0 0.0
    %704 = vmatpush2.msra.mxu0 0.0
    %705 = vmatprep.subr.mxu0 0.0
    %706 = vmatpush2.msra.mxu0 0.0
    %707 = vmatprep.subr.mxu0 0.0
    %708 = vmatpush2.msra.mxu0 0.0
    %709 = vmatprep.subr.mxu0 0.0
    %710 = vmatpush2.msra.mxu0 0.0
    %711 = vmatprep.subr.mxu0 0.0
    %712 = vmatpush2.msra.mxu0 0.0
    %713 = vmatprep.subr.mxu0 0.0
    %714 = vmatpush2.msra.mxu0 0.0
    %715 = vmatprep.subr.mxu0 0.0
    %716 = vmatpush2.msra.mxu0 0.0
    %717 = vmatprep.subr.mxu0 0.0
    %718 = vmatpush2.msra.mxu0 0.0
    %719 = vmatprep.subr.mxu0 0.0
    %720 = vmatpush2.msra.mxu0 0.0
    %721 = vmatprep.subr.mxu0 0.0
    %722 = vmatpush2.msra.mxu0 0.0
    %723 = vmatprep.subr.mxu0 0.0
    %724 = vmatpush2.msra.mxu0 0.0
    %725 = vmatprep.subr.mxu0 0.0
    %726 = vmatpush2.msra.mxu0 0.0
    %727 = vmatprep.mubr.f32.mxu0 0.0
    %728 = vmatmul.mubr.f32.gmra.mxu0 %v661
    %v729 = vpop.f32.mrf.mxu0
    %v730 = vadd.f32 0.0, %v729
    %v731 = vpop.f32.mrf.mxu0
    %732 = vdwg.mxu0
    %v733 = vadd.f32 %v628, %v730
    %v734 = vld [vmem:[%s3] sm:$0x1]
    %v736 = vlaneseq
    %v737 = vshrl.u32 %v736, 7
    %v738 = vsub.s32 0, %v737
    %v739 = vrot.slane %v734, %v738
    %v741 = vadd.f32 %v733, %v739
    %742 = vst [vmem:[#allocation7] sm:$0xff] %v741
    // Predicated region
    $region26: #{tpu_custom_call.1} parent=1 // pred_check
      _
    $region27: #{tpu_custom_call.1} parent=1 // pred_check_branch
      %744 = sbr.rel (0) target = $region29
    $region28: #{tpu_custom_call.1} parent=1 // pred_region
      %s746 = ssub.s32 128, 128
      %747 = vsyncadd [#allocation4], %s746
      %s749 = sshll.u32 [#allocation7], 4
      %s750 = int_to_ptr.vmem [resolvable:$true] %s749
      %752 = dma.vmem_to_hbm [thread:$0]  %s750, 128, %s4, [#allocation4]
    $region29: #{tpu_custom_call.1} parent=1 // pred_fallthru
      _
    // Predicated region
    $region30: #{tpu_custom_call.1} parent=1 // pred_check
      _
    $region31: #{tpu_custom_call.1} parent=1 // pred_check_branch
      %754 = sbr.rel (0) target = $region33
    $region32: #{tpu_custom_call.1} parent=1 // pred_region
      %755 = dma.done [#allocation4], 128
    $region33: #{tpu_custom_call.1} parent=1 // pred_fallthru
      _
    %756 = vsyncpa [#allocation3], 1
    %757 = vsyncpa [#allocation6], 1
    %758 = vsyncpa [#allocation4], 1

</llo_original>
